<compile_context>
chip_gen: v5e
topology: v5e:2x2
jax: 0.10.0
libtpu: 0.0.40
codegen_flags: <defaults>
</compile_context>

<pallas_src>
import numpy as np
import jax
import jax.numpy as jnp
from jax.experimental import pallas as pl
from jax.experimental.pallas import tpu as pltpu


def _interaction_kernel(x_ref, gi_ref, gj_ref, o_ref):
    x = x_ref[...]                                                        # (tb, F)
    # One-hot selection matmuls on the MXU: gather x_i and x_j per triu pair.
    left = jnp.dot(x, gi_ref[...], preferred_element_type=jnp.float32)    # (tb, P)
    right = jnp.dot(x, gj_ref[...], preferred_element_type=jnp.float32)   # (tb, P)
    # Elementwise product on the VPU -> upper-triangle outer-product entries.
    o_ref[...] = (left * right).astype(o_ref.dtype)


def _pick_batch_tile(batch):
    # Second-to-last block dim must be a multiple of 8 or equal the full dim.
    for t in (512, 256, 128, 64, 32, 16, 8):
        if batch % t == 0:
            return t
    return batch  # small / odd batch: one full-size block (legal: equals full dim)


def feature_interaction(x):
    """x: (B, F) float -> (B, F*(F+1)//2) float32, row-major upper-triangle order."""
    B, F = x.shape
    P = F * (F + 1) // 2
    if x.dtype != jnp.float32:
        x = x.astype(jnp.float32)

    # Static (i, j) pairs in torch boolean-mask (row-major) order; build one-hot
    # selection matrices once at trace time.
    rows, cols = np.triu_indices(F)
    gi_np = np.zeros((F, P), np.float32)
    gj_np = np.zeros((F, P), np.float32)
    gi_np[rows, np.arange(P)] = 1.0
    gj_np[cols, np.arange(P)] = 1.0
    gi = jnp.asarray(gi_np)
    gj = jnp.asarray(gj_np)

    tile_b = _pick_batch_tile(B)
    grid = (B // tile_b,)

    return pl.pallas_call(
        _interaction_kernel,
        out_shape=jax.ShapeDtypeStruct((B, P), jnp.float32),
        grid=grid,
        in_specs=[
            pl.BlockSpec((tile_b, F), lambda i: (i, 0)),   # batch-tiled activations
            pl.BlockSpec((F, P), lambda i: (0, 0)),        # Gi: resident in VMEM
            pl.BlockSpec((F, P), lambda i: (0, 0)),        # Gj: resident in VMEM
        ],
        out_specs=pl.BlockSpec((tile_b, P), lambda i: (i, 0)),
        compiler_params=pltpu.CompilerParams(
            dimension_semantics=("parallel",),
        ),
    )(x, gi, gj)


if __name__ == "__main__":
    B, F = 8, 32                      # small test shapes; P = 528
    key = jax.random.PRNGKey(0)
    x = jax.random.normal(key, (B, F), jnp.float32)

    out = feature_interaction(x)
    jax.block_until_ready(out)
    assert out.shape == (B, F * (F + 1) // 2)

    # Reference (plain JAX) in the same torch triu-mask order.  Tolerance is loose
    # enough to accommodate MXU f32 multi-pass decomposition of the selection matmuls
    # while still catching any indexing/ordering error (which would change values
    # entirely).
    outer = x[:, :, None] * x[:, None, :]
    iu, ju = np.triu_indices(F)
    ref = outer[:, iu, ju]
    np.testing.assert_allclose(np.asarray(out), np.asarray(ref), rtol=2e-2, atol=1e-2)

    print("KERNEL_OK")
</pallas_src>

<mosaic_0001>
module attributes {stable_mosaic.version = 11 : i64} {
  func.func @_interaction_kernel(%arg0: i32, %arg1: memref<8x32xf32, #tpu.memory_space<vmem>>, %arg2: memref<32x528xf32, #tpu.memory_space<vmem>>, %arg3: memref<32x528xf32, #tpu.memory_space<vmem>>, %arg4: memref<8x528xf32, #tpu.memory_space<vmem>>) attributes {dimension_semantics = [#tpu.dimension_semantics<parallel>], iteration_bounds = array<i64: 1>, scalar_prefetch = 0 : i64, scratch_operands = 0 : i64, tpu.core_type = #tpu.core_type<tc>, window_params = [{transform_indices = @transform_0, window_bounds = array<i64: 8, 32>}, {pipeline_mode = #tpu.pipeline_mode<synchronous>, transform_indices = @transform_1, window_bounds = array<i64: 32, 528>}, {pipeline_mode = #tpu.pipeline_mode<synchronous>, transform_indices = @transform_2, window_bounds = array<i64: 32, 528>}, {transform_indices = @transform_3, window_bounds = array<i64: 8, 528>}]} {
    %c0 = arith.constant 0 : index
    %c0_0 = arith.constant 0 : index
    %0 = vector.load %arg1[%c0, %c0_0] : memref<8x32xf32, #tpu.memory_space<vmem>>, vector<8x32xf32>
    %c0_1 = arith.constant 0 : index
    %c0_2 = arith.constant 0 : index
    %1 = vector.load %arg2[%c0_1, %c0_2] : memref<32x528xf32, #tpu.memory_space<vmem>>, vector<32x528xf32>
    %cst = arith.constant dense<0.000000e+00> : vector<8x528xf32>
    %2 = tpu.matmul %0, %1, %cst {dimension_numbers = #tpu.dot_dimension_numbers<[1], [0], [0], [1], [0, 0, 1, 1], [], []>} : vector<8x32xf32>, vector<32x528xf32>, vector<8x528xf32> -> vector<8x528xf32>
    %c0_3 = arith.constant 0 : index
    %c0_4 = arith.constant 0 : index
    %3 = vector.load %arg3[%c0_3, %c0_4] : memref<32x528xf32, #tpu.memory_space<vmem>>, vector<32x528xf32>
    %cst_5 = arith.constant dense<0.000000e+00> : vector<8x528xf32>
    %4 = tpu.matmul %0, %3, %cst_5 {dimension_numbers = #tpu.dot_dimension_numbers<[1], [0], [0], [1], [0, 0, 1, 1], [], []>} : vector<8x32xf32>, vector<32x528xf32>, vector<8x528xf32> -> vector<8x528xf32>
    %5 = arith.mulf %2, %4 : vector<8x528xf32>
    %c0_6 = arith.constant 0 : index
    %c0_7 = arith.constant 0 : index
    %6 = vector.load %arg4[%c0_6, %c0_7] : memref<8x528xf32, #tpu.memory_space<vmem>>, vector<8x528xf32>
    tpu.vector_store %arg4[%c0_6, %c0_7], %5 {strides = array<i32>} : memref<8x528xf32, #tpu.memory_space<vmem>>, vector<8x528xf32>,
    return
  }
  func.func @transform_0(%arg0: i32) -> (i32, i32) {
    %c0_i32 = arith.constant 0 : i32
    %c0_i32_0 = arith.constant 0 : i32
    return %arg0, %c0_i32 : i32, i32
  }
  func.func @transform_1(%arg0: i32) -> (i32, i32) {
    %c0_i32 = arith.constant 0 : i32
    %c0_i32_0 = arith.constant 0 : i32
    %c0_i32_1 = arith.constant 0 : i32
    return %c0_i32, %c0_i32_0 : i32, i32
  }
  func.func @transform_2(%arg0: i32) -> (i32, i32) {
    %c0_i32 = arith.constant 0 : i32
    %c0_i32_0 = arith.constant 0 : i32
    %c0_i32_1 = arith.constant 0 : i32
    return %c0_i32, %c0_i32_0 : i32, i32
  }
  func.func @transform_3(%arg0: i32) -> (i32, i32) {
    %c0_i32 = arith.constant 0 : i32
    %c0_i32_0 = arith.constant 0 : i32
    return %arg0, %c0_i32 : i32, i32
  }
}

</mosaic_0001>

<llo_original>
// kernel: tpu_custom_call.1
$region0: #{tpu_custom_call.1}
  #allocation0 [shape = 'u32[]', space=smem, size = 0x4, offset = 0x4, fixed_abs, tag = 'smem constant byte address 0x4 - core index']
  #allocation1 [shape = 'u32[72,128]{1,0:T(1,128)}', space=vmem, size = 0x9000, scoped, tag = 'internal scratch']
  %s0 = inlined_call_operand.hbm [shape: f32[8,32], index: 0, kind: input, shape index: {}]
  %s1 = inlined_call_operand.hbm [shape: f32[32,528], index: 1, kind: input, shape index: {}]
  %s2 = inlined_call_operand.hbm [shape: f32[32,528], index: 2, kind: input, shape index: {}]
  %s3 = inlined_call_operand.hbm [shape: f32[8,528], index: 3, kind: output, shape index: {}]
  %s4 = sld [smem:[#allocation0]]
  $region34: #{tpu_custom_call.1} parent=0
    _
  %s6 = ssub.s32 1, %s4
  %s7 = scalar_select 0, %s6, %s4
  $region1: #{tpu_custom_call.1} parent=0
    #allocation2 [shape = 'u8[4096]{0}', space=vmem, size = 0x1000, scoped, tag = 'input window, operand 0, single buffered']
    #allocation3 [shape = 's32[1]{0}', space=sflag, size = 0x4, scoped, tag = 'scoped memory for tpu_custom_call.1']
    #allocation4 [shape = 's32[1]{0}', space=sflag, size = 0x4, scoped, tag = 'scoped memory for tpu_custom_call.1']
    #allocation5 [shape = 'u8[81920]{0}', space=vmem, size = 0x14000, scoped, tag = 'input window, operand 1, single buffered']
    #allocation6 [shape = 's32[1]{0}', space=sflag, size = 0x4, scoped, tag = 'scoped memory for tpu_custom_call.1']
    #allocation7 [shape = 'u8[81920]{0}', space=vmem, size = 0x14000, scoped, tag = 'input window, operand 2, single buffered']
    #allocation8 [shape = 'u8[20480]{0}', space=vmem, size = 0x5000, scoped, tag = 'output window, operand 0, single buffered']
    %8 = vsyncpa [#allocation3], 0
    %9 = vsyncpa [#allocation6], 0
    %10 = vsyncpa [#allocation4], 0
    // Predicated region
    $region2: #{tpu_custom_call.1} parent=1 // pred_check
      _
    $region3: #{tpu_custom_call.1} parent=1 // pred_check_branch
      %12 = sbr.rel (0) target = $region5
    $region4: #{tpu_custom_call.1} parent=1 // pred_region
      %14 = vsyncadd [#allocation3], 0
      %s16 = sshll.u32 %s0, 4
      %s17 = int_to_ptr.hbm [resolvable:$true] %s16
      %s18 = sshll.u32 [#allocation2], 4
      %s19 = int_to_ptr.vmem [resolvable:$true] %s18
      %21 = dma.hbm_to_vmem [thread:$0]  %s17, 128, %s19, [#allocation3]
    $region5: #{tpu_custom_call.1} parent=1 // pred_fallthru
      _
    // Predicated region
    $region6: #{tpu_custom_call.1} parent=1 // pred_check
      _
    $region7: #{tpu_custom_call.1} parent=1 // pred_check_branch
      %23 = sbr.rel (0) target = $region9
    $region8: #{tpu_custom_call.1} parent=1 // pred_region
      %25 = vsyncadd [#allocation6], 0
      %s26 = sshll.u32 %s1, 4
      %s27 = int_to_ptr.hbm [resolvable:$true] %s26
      %s28 = sshll.u32 [#allocation5], 4
      %s29 = int_to_ptr.vmem [resolvable:$true] %s28
      %34 = dma.hbm_to_vmem [thread:$0]  %s27, 2560, %s29, [#allocation6], 640, 640, 40
    $region9: #{tpu_custom_call.1} parent=1 // pred_fallthru
      _
    // Predicated region
    $region10: #{tpu_custom_call.1} parent=1 // pred_check
      _
    $region11: #{tpu_custom_call.1} parent=1 // pred_check_branch
      %36 = sbr.rel (0) target = $region13
    $region12: #{tpu_custom_call.1} parent=1 // pred_region
      %38 = vsyncadd [#allocation6], 0
      %s39 = sshll.u32 %s2, 4
      %s40 = int_to_ptr.hbm [resolvable:$true] %s39
      %s41 = sshll.u32 [#allocation7], 4
      %s42 = int_to_ptr.vmem [resolvable:$true] %s41
      %47 = dma.hbm_to_vmem [thread:$0]  %s40, 2560, %s42, [#allocation6], 640, 640, 40
    $region13: #{tpu_custom_call.1} parent=1 // pred_fallthru
      _
    // Predicated region
    $region14: #{tpu_custom_call.1} parent=1 // pred_check
      _
    $region15: #{tpu_custom_call.1} parent=1 // pred_check_branch
      %49 = sbr.rel (0) target = $region17
    $region16: #{tpu_custom_call.1} parent=1 // pred_region
      %51 = dma.done [#allocation3], 128
    $region17: #{tpu_custom_call.1} parent=1 // pred_fallthru
      _
    // Predicated region
    $region18: #{tpu_custom_call.1} parent=1 // pred_check
      _
    $region19: #{tpu_custom_call.1} parent=1 // pred_check_branch
      %53 = sbr.rel (0) target = $region21
    $region20: #{tpu_custom_call.1} parent=1 // pred_region
      %55 = dma.done [#allocation6], 2560
    $region21: #{tpu_custom_call.1} parent=1 // pred_fallthru
      _
    // Predicated region
    $region22: #{tpu_custom_call.1} parent=1 // pred_check
      _
    $region23: #{tpu_custom_call.1} parent=1 // pred_check_branch
      %57 = sbr.rel (0) target = $region25
    $region24: #{tpu_custom_call.1} parent=1 // pred_region
      %59 = dma.done [#allocation6], 2560
    $region25: #{tpu_custom_call.1} parent=1 // pred_fallthru
      _
    %v60 = vld [vmem:[#allocation2] sm:$0xff]
    %v61 = vld [vmem:[#allocation5] sm:$0xff]
    %v62 = vld [vmem:[#allocation5 + $0x8] sm:$0xff]
    %v63 = vld [vmem:[#allocation5 + $0x10] sm:$0xff]
    %v64 = vld [vmem:[#allocation5 + $0x18] sm:$0xff]
    %v65 = vld [vmem:[#allocation5 + $0x20] sm:$0xff]
    %v66 = vld [vmem:[#allocation5 + $0x28] sm:$0xff]
    %v67 = vld [vmem:[#allocation5 + $0x30] sm:$0xff]
    %v68 = vld [vmem:[#allocation5 + $0x38] sm:$0xff]
    %v69 = vld [vmem:[#allocation5 + $0x40] sm:$0xff]
    %v70 = vld [vmem:[#allocation5 + $0x48] sm:$0xff]
    %v71 = vld [vmem:[#allocation5 + $0x50] sm:$0xff]
    %v72 = vld [vmem:[#allocation5 + $0x58] sm:$0xff]
    %v73 = vld [vmem:[#allocation5 + $0x60] sm:$0xff]
    %v74 = vld [vmem:[#allocation5 + $0x68] sm:$0xff]
    %v75 = vld [vmem:[#allocation5 + $0x70] sm:$0xff]
    %v76 = vld [vmem:[#allocation5 + $0x78] sm:$0xff]
    %v77 = vld [vmem:[#allocation5 + $0x80] sm:$0xff]
    %v78 = vld [vmem:[#allocation5 + $0x88] sm:$0xff]
    %v79 = vld [vmem:[#allocation5 + $0x90] sm:$0xff]
    %v80 = vld [vmem:[#allocation5 + $0x98] sm:$0xff]
    %vm81 = vcmask 261120
    %v83 = vsel %vm81, %v60, 0
    %85 = vmatpush.msra.mxu0 0.0
    %86 = vmatpush.msra.mxu0 0.0
    %87 = vmatpush.msra.mxu0 0.0
    %88 = vmatpush.msra.mxu0 0.0
    %89 = vmatpush.msra.mxu0 0.0
    %90 = vmatpush.msra.mxu0 0.0
    %91 = vmatpush.msra.mxu0 0.0
    %92 = vmatpush.msra.mxu0 0.0
    %93 = vmatpush.msra.mxu0 0.0
    %94 = vmatpush.msra.mxu0 0.0
    %95 = vmatpush.msra.mxu0 0.0
    %96 = vmatpush.msra.mxu0 0.0
    %97 = vmatpush.msra.mxu0 %v76
    %98 = vmatpush.msra.mxu0 %v71
    %99 = vmatpush.msra.mxu0 %v66
    %100 = vmatpush.msra.mxu0 %v61
    %101 = vmatmul.f32.gmra.mxu0 %v83
    %v102 = vpop.f32.mrf.mxu0
    %v103 = vadd.f32 0.0, %v102
    %104 = vdwg.mxu0
    %105 = vmatpush.msra.mxu0 0.0
    %106 = vmatpush.msra.mxu0 0.0
    %107 = vmatpush.msra.mxu0 0.0
    %108 = vmatpush.msra.mxu0 0.0
    %109 = vmatpush.msra.mxu0 0.0
    %110 = vmatpush.msra.mxu0 0.0
    %111 = vmatpush.msra.mxu0 0.0
    %112 = vmatpush.msra.mxu0 0.0
    %113 = vmatpush.msra.mxu0 0.0
    %114 = vmatpush.msra.mxu0 0.0
    %115 = vmatpush.msra.mxu0 0.0
    %116 = vmatpush.msra.mxu0 0.0
    %117 = vmatpush.msra.mxu0 %v77
    %118 = vmatpush.msra.mxu0 %v72
    %119 = vmatpush.msra.mxu0 %v67
    %120 = vmatpush.msra.mxu0 %v62
    %121 = vmatmul.f32.gmra.mxu0 %v83
    %v122 = vpop.f32.mrf.mxu0
    %v123 = vadd.f32 0.0, %v122
    %124 = vdwg.mxu0
    %125 = vmatpush.msra.mxu0 0.0
    %126 = vmatpush.msra.mxu0 0.0
    %127 = vmatpush.msra.mxu0 0.0
    %128 = vmatpush.msra.mxu0 0.0
    %129 = vmatpush.msra.mxu0 0.0
    %130 = vmatpush.msra.mxu0 0.0
    %131 = vmatpush.msra.mxu0 0.0
    %132 = vmatpush.msra.mxu0 0.0
    %133 = vmatpush.msra.mxu0 0.0
    %134 = vmatpush.msra.mxu0 0.0
    %135 = vmatpush.msra.mxu0 0.0
    %136 = vmatpush.msra.mxu0 0.0
    %137 = vmatpush.msra.mxu0 %v78
    %138 = vmatpush.msra.mxu0 %v73
    %139 = vmatpush.msra.mxu0 %v68
    %140 = vmatpush.msra.mxu0 %v63
    %141 = vmatmul.f32.gmra.mxu0 %v83
    %v142 = vpop.f32.mrf.mxu0
    %v143 = vadd.f32 0.0, %v142
    %144 = vdwg.mxu0
    %145 = vmatpush.msra.mxu0 0.0
    %146 = vmatpush.msra.mxu0 0.0
    %147 = vmatpush.msra.mxu0 0.0
    %148 = vmatpush.msra.mxu0 0.0
    %149 = vmatpush.msra.mxu0 0.0
    %150 = vmatpush.msra.mxu0 0.0
    %151 = vmatpush.msra.mxu0 0.0
    %152 = vmatpush.msra.mxu0 0.0
    %153 = vmatpush.msra.mxu0 0.0
    %154 = vmatpush.msra.mxu0 0.0
    %155 = vmatpush.msra.mxu0 0.0
    %156 = vmatpush.msra.mxu0 0.0
    %157 = vmatpush.msra.mxu0 %v79
    %158 = vmatpush.msra.mxu0 %v74
    %159 = vmatpush.msra.mxu0 %v69
    %160 = vmatpush.msra.mxu0 %v64
    %161 = vmatmul.f32.gmra.mxu0 %v83
    %v162 = vpop.f32.mrf.mxu0
    %v163 = vadd.f32 0.0, %v162
    %164 = vdwg.mxu0
    %165 = vmatpush.msra.mxu0 0.0
    %166 = vmatpush.msra.mxu0 0.0
    %167 = vmatpush.msra.mxu0 0.0
    %168 = vmatpush.msra.mxu0 0.0
    %169 = vmatpush.msra.mxu0 0.0
    %170 = vmatpush.msra.mxu0 0.0
    %171 = vmatpush.msra.mxu0 0.0
    %172 = vmatpush.msra.mxu0 0.0
    %173 = vmatpush.msra.mxu0 0.0
    %174 = vmatpush.msra.mxu0 0.0
    %175 = vmatpush.msra.mxu0 0.0
    %176 = vmatpush.msra.mxu0 0.0
    %177 = vmatpush.msra.mxu0 %v80
    %178 = vmatpush.msra.mxu0 %v75
    %179 = vmatpush.msra.mxu0 %v70
    %180 = vmatpush.msra.mxu0 %v65
    %181 = vmatmul.f32.gmra.mxu0 %v83
    %v182 = vpop.f32.mrf.mxu0
    %v183 = vadd.f32 0.0, %v182
    %184 = vdwg.mxu0
    %v185 = vld [vmem:[#allocation7] sm:$0xff]
    %v186 = vld [vmem:[#allocation7 + $0x8] sm:$0xff]
    %v187 = vld [vmem:[#allocation7 + $0x10] sm:$0xff]
    %v188 = vld [vmem:[#allocation7 + $0x18] sm:$0xff]
    %v189 = vld [vmem:[#allocation7 + $0x20] sm:$0xff]
    %v190 = vld [vmem:[#allocation7 + $0x28] sm:$0xff]
    %v191 = vld [vmem:[#allocation7 + $0x30] sm:$0xff]
    %v192 = vld [vmem:[#allocation7 + $0x38] sm:$0xff]
    %v193 = vld [vmem:[#allocation7 + $0x40] sm:$0xff]
    %v194 = vld [vmem:[#allocation7 + $0x48] sm:$0xff]
    %v195 = vld [vmem:[#allocation7 + $0x50] sm:$0xff]
    %v196 = vld [vmem:[#allocation7 + $0x58] sm:$0xff]
    %v197 = vld [vmem:[#allocation7 + $0x60] sm:$0xff]
    %v198 = vld [vmem:[#allocation7 + $0x68] sm:$0xff]
    %v199 = vld [vmem:[#allocation7 + $0x70] sm:$0xff]
    %v200 = vld [vmem:[#allocation7 + $0x78] sm:$0xff]
    %v201 = vld [vmem:[#allocation7 + $0x80] sm:$0xff]
    %v202 = vld [vmem:[#allocation7 + $0x88] sm:$0xff]
    %v203 = vld [vmem:[#allocation7 + $0x90] sm:$0xff]
    %v204 = vld [vmem:[#allocation7 + $0x98] sm:$0xff]
    %205 = vmatpush.msra.mxu0 0.0
    %206 = vmatpush.msra.mxu0 0.0
    %207 = vmatpush.msra.mxu0 0.0
    %208 = vmatpush.msra.mxu0 0.0
    %209 = vmatpush.msra.mxu0 0.0
    %210 = vmatpush.msra.mxu0 0.0
    %211 = vmatpush.msra.mxu0 0.0
    %212 = vmatpush.msra.mxu0 0.0
    %213 = vmatpush.msra.mxu0 0.0
    %214 = vmatpush.msra.mxu0 0.0
    %215 = vmatpush.msra.mxu0 0.0
    %216 = vmatpush.msra.mxu0 0.0
    %217 = vmatpush.msra.mxu0 %v200
    %218 = vmatpush.msra.mxu0 %v195
    %219 = vmatpush.msra.mxu0 %v190
    %220 = vmatpush.msra.mxu0 %v185
    %221 = vmatmul.f32.gmra.mxu0 %v83
    %v222 = vpop.f32.mrf.mxu0
    %v223 = vadd.f32 0.0, %v222
    %224 = vdwg.mxu0
    %225 = vmatpush.msra.mxu0 0.0
    %226 = vmatpush.msra.mxu0 0.0
    %227 = vmatpush.msra.mxu0 0.0
    %228 = vmatpush.msra.mxu0 0.0
    %229 = vmatpush.msra.mxu0 0.0
    %230 = vmatpush.msra.mxu0 0.0
    %231 = vmatpush.msra.mxu0 0.0
    %232 = vmatpush.msra.mxu0 0.0
    %233 = vmatpush.msra.mxu0 0.0
    %234 = vmatpush.msra.mxu0 0.0
    %235 = vmatpush.msra.mxu0 0.0
    %236 = vmatpush.msra.mxu0 0.0
    %237 = vmatpush.msra.mxu0 %v201
    %238 = vmatpush.msra.mxu0 %v196
    %239 = vmatpush.msra.mxu0 %v191
    %240 = vmatpush.msra.mxu0 %v186
    %241 = vmatmul.f32.gmra.mxu0 %v83
    %v242 = vpop.f32.mrf.mxu0
    %v243 = vadd.f32 0.0, %v242
    %244 = vdwg.mxu0
    %245 = vmatpush.msra.mxu0 0.0
    %246 = vmatpush.msra.mxu0 0.0
    %247 = vmatpush.msra.mxu0 0.0
    %248 = vmatpush.msra.mxu0 0.0
    %249 = vmatpush.msra.mxu0 0.0
    %250 = vmatpush.msra.mxu0 0.0
    %251 = vmatpush.msra.mxu0 0.0
    %252 = vmatpush.msra.mxu0 0.0
    %253 = vmatpush.msra.mxu0 0.0
    %254 = vmatpush.msra.mxu0 0.0
    %255 = vmatpush.msra.mxu0 0.0
    %256 = vmatpush.msra.mxu0 0.0
    %257 = vmatpush.msra.mxu0 %v202
    %258 = vmatpush.msra.mxu0 %v197
    %259 = vmatpush.msra.mxu0 %v192
    %260 = vmatpush.msra.mxu0 %v187
    %261 = vmatmul.f32.gmra.mxu0 %v83
    %v262 = vpop.f32.mrf.mxu0
    %v263 = vadd.f32 0.0, %v262
    %264 = vdwg.mxu0
    %265 = vmatpush.msra.mxu0 0.0
    %266 = vmatpush.msra.mxu0 0.0
    %267 = vmatpush.msra.mxu0 0.0
    %268 = vmatpush.msra.mxu0 0.0
    %269 = vmatpush.msra.mxu0 0.0
    %270 = vmatpush.msra.mxu0 0.0
    %271 = vmatpush.msra.mxu0 0.0
    %272 = vmatpush.msra.mxu0 0.0
    %273 = vmatpush.msra.mxu0 0.0
    %274 = vmatpush.msra.mxu0 0.0
    %275 = vmatpush.msra.mxu0 0.0
    %276 = vmatpush.msra.mxu0 0.0
    %277 = vmatpush.msra.mxu0 %v203
    %278 = vmatpush.msra.mxu0 %v198
    %279 = vmatpush.msra.mxu0 %v193
    %280 = vmatpush.msra.mxu0 %v188
    %281 = vmatmul.f32.gmra.mxu0 %v83
    %v282 = vpop.f32.mrf.mxu0
    %v283 = vadd.f32 0.0, %v282
    %284 = vdwg.mxu0
    %285 = vmatpush.msra.mxu0 0.0
    %286 = vmatpush.msra.mxu0 0.0
    %287 = vmatpush.msra.mxu0 0.0
    %288 = vmatpush.msra.mxu0 0.0
    %289 = vmatpush.msra.mxu0 0.0
    %290 = vmatpush.msra.mxu0 0.0
    %291 = vmatpush.msra.mxu0 0.0
    %292 = vmatpush.msra.mxu0 0.0
    %293 = vmatpush.msra.mxu0 0.0
    %294 = vmatpush.msra.mxu0 0.0
    %295 = vmatpush.msra.mxu0 0.0
    %296 = vmatpush.msra.mxu0 0.0
    %297 = vmatpush.msra.mxu0 %v204
    %298 = vmatpush.msra.mxu0 %v199
    %299 = vmatpush.msra.mxu0 %v194
    %300 = vmatpush.msra.mxu0 %v189
    %301 = vmatmul.f32.gmra.mxu0 %v83
    %v302 = vpop.f32.mrf.mxu0
    %v303 = vadd.f32 0.0, %v302
    %304 = vdwg.mxu0
    %v305 = vmul.f32 %v103, %v223
    %v306 = vmul.f32 %v123, %v243
    %v307 = vmul.f32 %v143, %v263
    %v308 = vmul.f32 %v163, %v283
    %v309 = vmul.f32 %v183, %v303
    %310 = vst [vmem:[#allocation8] sm:$0xff] %v305
    %311 = vst [vmem:[#allocation8 + $0x8] sm:$0xff] %v306
    %312 = vst [vmem:[#allocation8 + $0x10] sm:$0xff] %v307
    %313 = vst [vmem:[#allocation8 + $0x18] sm:$0xff] %v308
    %vm314 = vcmask 130048
    %315 = vst.msk [vmem:[#allocation8 + $0x20] sm:$0xff] %vm314, %v309
    // Predicated region
    $region26: #{tpu_custom_call.1} parent=1 // pred_check
      _
    $region27: #{tpu_custom_call.1} parent=1 // pred_check_branch
      %317 = sbr.rel (0) target = $region29
    $region28: #{tpu_custom_call.1} parent=1 // pred_region
      %319 = vsyncadd [#allocation4], 0
      %s321 = sshll.u32 [#allocation8], 4
      %s322 = int_to_ptr.vmem [resolvable:$true] %s321
      %s323 = sshll.u32 %s3, 4
      %s324 = int_to_ptr.hbm [resolvable:$true] %s323
      %326 = dma.vmem_to_hbm [thread:$0]  %s322, 640, %s324, [#allocation4]
    $region29: #{tpu_custom_call.1} parent=1 // pred_fallthru
      _
    // Predicated region
    $region30: #{tpu_custom_call.1} parent=1 // pred_check
      _
    $region31: #{tpu_custom_call.1} parent=1 // pred_check_branch
      %328 = sbr.rel (0) target = $region33
    $region32: #{tpu_custom_call.1} parent=1 // pred_region
      %330 = dma.done [#allocation4], 640
    $region33: #{tpu_custom_call.1} parent=1 // pred_fallthru
      _
    %331 = vsyncpa [#allocation3], 1
    %332 = vsyncpa [#allocation6], 1
    %333 = vsyncpa [#allocation4], 1

</llo_original>
